<compile_context>
chip_gen: v6e
topology: v6e:2x2x1
jax: 0.10.0
libtpu: 0.0.40
codegen_flags: <defaults>
</compile_context>

<pallas_src>
import math

import jax
import jax.numpy as jnp
from jax.experimental import pallas as pl
from jax.experimental.pallas import tpu as pltpu


# ----------------------------- helpers --------------------------------------

def _round_up(x, m):
    return ((x + m - 1) // m) * m


def _largest_aligned_divisor(dim, target, align):
    """Largest divisor of `dim` that is a multiple of `align` and <= target.
    Falls back to the full dim (a full-extent block is always legal)."""
    t = min(target, dim)
    t -= t % align
    while t >= align:
        if dim % t == 0:
            return t
        t -= align
    return dim


_VMEM_LIMIT_CACHE = None


def _vmem_limit():
    """Scoped-VMEM budget per TPU generation: ~48 MiB on 128-MiB parts (v5e/v6e),
    ~40 MiB on v7x (64 MiB physical).  Safe constant fallback if the query fails."""
    global _VMEM_LIMIT_CACHE
    if _VMEM_LIMIT_CACHE is None:
        mib = 1024 * 1024
        try:
            cap = int(pltpu.get_tpu_info().vmem_capacity_bytes)
            _VMEM_LIMIT_CACHE = min(48 * mib, max(32 * mib, (cap * 5) // 8))
        except Exception:
            _VMEM_LIMIT_CACHE = 40 * mib
    return _VMEM_LIMIT_CACHE


# ----------------------------- tiled linear ---------------------------------

def _linear_kernel(x_ref, w_ref, b_ref, o_ref, acc_ref):
    k = pl.program_id(2)

    @pl.when(k == 0)
    def _init():
        acc_ref[...] = jnp.zeros_like(acc_ref)

    # bf16 MXU operands, f32 accumulation (casts are no-ops if inputs are bf16).
    x = x_ref[...].astype(jnp.bfloat16)
    w = w_ref[...].astype(jnp.bfloat16)
    acc_ref[...] += jnp.dot(x, w, preferred_element_type=jnp.float32)

    @pl.when(k == pl.num_programs(2) - 1)
    def _finalize():
        o_ref[...] = (acc_ref[...] + b_ref[...].astype(jnp.float32)).astype(o_ref.dtype)


def linear(x2d, w, b, *, tm_target=256, tn_target=512, tk_target=512):
    """x2d: (M, K), w: (K, N), b: (N,) -> (M, N).  Tiled, pipelined bf16 MXU matmul
    with f32 accumulation.  M is padded to a row-tile multiple so the row tile never
    silently becomes the whole (possibly huge) dimension."""
    M, K = x2d.shape
    Kw, N = w.shape
    assert K == Kw
    tn = _largest_aligned_divisor(N, tn_target, 128)
    tk = _largest_aligned_divisor(K, tk_target, 128)
    tm = min(tm_target, _round_up(M, 8))
    m_pad = _round_up(M, tm)
    x_in = x2d if m_pad == M else jnp.pad(x2d, ((0, m_pad - M), (0, 0)))
    grid = (m_pad // tm, N // tn, K // tk)
    out = pl.pallas_call(
        _linear_kernel,
        out_shape=jax.ShapeDtypeStruct((m_pad, N), x2d.dtype),
        grid_spec=pltpu.PrefetchScalarGridSpec(
            num_scalar_prefetch=0,
            grid=grid,
            in_specs=[
                pl.BlockSpec((tm, tk), lambda i, j, k: (i, k)),
                pl.BlockSpec((tk, tn), lambda i, j, k: (k, j)),
                pl.BlockSpec((1, tn), lambda i, j, k: (0, j)),
            ],
            out_specs=pl.BlockSpec((tm, tn), lambda i, j, k: (i, j)),
            scratch_shapes=[pltpu.VMEM((tm, tn), jnp.float32)],
        ),
        compiler_params=pltpu.CompilerParams(
            dimension_semantics=("parallel", "parallel", "arbitrary"),
            vmem_limit_bytes=_vmem_limit(),
        ),
    )(x_in, w, b.reshape(1, N))
    return out if m_pad == M else out[:M]


# ----------------------------- attention core -------------------------------

def _attn_head_kernel(q_ref, k_ref, v_ref, o_ref):
    # q/k/v: (N, D) blocks for one (batch, head).  q is already scaled by
    # 1/sqrt(D) (folded into the qkv weights host-side).
    q = q_ref[...]
    k = k_ref[...]
    v = v_ref[...]
    # S = q @ k^T without materializing k.T (contract over D of both operands).
    s = jax.lax.dot_general(q, k, dimension_numbers=(((1,), (1,)), ((), ())),
                            preferred_element_type=jnp.float32)            # (N, N) f32
    m = jnp.max(s, axis=-1, keepdims=True)
    p = jnp.exp(s - m)                                                      # f32 softmax math
    denom = jnp.sum(p, axis=-1, keepdims=True)
    o = jnp.dot(p.astype(v.dtype), v, preferred_element_type=jnp.float32)  # (N, D) f32
    o_ref[...] = (o * pl.reciprocal(denom, approx=False)).astype(o_ref.dtype)


def attention_core(q, k, v):
    """q, k, v: (B, H, N, D) -> (B, H, N, D).  One (batch, head) per grid step; both
    grid axes are parallel (megacore / 2-TC friendly); every block is a full (N, D)
    tile so there are no relayouts or masked stores inside the kernel."""
    B, H, N, D = q.shape
    spec = pl.BlockSpec((None, None, N, D), lambda b, h: (b, h, 0, 0))
    return pl.pallas_call(
        _attn_head_kernel,
        out_shape=jax.ShapeDtypeStruct((B, H, N, D), q.dtype),
        grid_spec=pltpu.PrefetchScalarGridSpec(
            num_scalar_prefetch=0,
            grid=(B, H),
            in_specs=[spec, spec, spec],
            out_specs=spec,
        ),
        compiler_params=pltpu.CompilerParams(
            dimension_semantics=("parallel", "parallel"),
            vmem_limit_bytes=_vmem_limit(),
        ),
    )(q, k, v)


# ----------------------------- module wrapper --------------------------------

def init_attention_params(key, dim):
    """Weights stored transposed (in_features, out_features): y = x @ W + b.
    kaiming-normal fan_in (std = sqrt(2/fan_in)); biases uniform(+-1/sqrt(fan_in))."""
    k1, k2, k3, k4 = jax.random.split(key, 4)
    std = math.sqrt(2.0 / dim)
    bound = 1.0 / math.sqrt(dim)
    return {
        "w_qkv": std * jax.random.normal(k1, (dim, 3 * dim), jnp.float32),
        "b_qkv": jax.random.uniform(k2, (3 * dim,), jnp.float32, -bound, bound),
        "w_proj": std * jax.random.normal(k3, (dim, dim), jnp.float32),
        "b_proj": jax.random.uniform(k4, (dim,), jnp.float32, -bound, bound),
    }


def attention_forward(x, params, num_heads):
    """Equivalent of Attention.forward (non-flash / SDPA path)."""
    B, N, C = x.shape
    D = C // num_heads
    orig_dtype = x.dtype
    cdt = jnp.bfloat16

    # Fold 1/sqrt(D) into the q columns of the qkv projection (free, host/XLA side).
    scale = jnp.concatenate([
        jnp.full((C,), 1.0 / math.sqrt(D), jnp.float32),
        jnp.ones((2 * C,), jnp.float32),
    ])
    w_qkv = (params["w_qkv"] * scale).astype(cdt)
    b_qkv = (params["b_qkv"] * scale).astype(cdt)
    w_proj = params["w_proj"].astype(cdt)
    b_proj = params["b_proj"].astype(cdt)

    qkv = linear(x.reshape(B * N, C).astype(cdt), w_qkv, b_qkv)          # (B*N, 3C) bf16
    # Split heads with one XLA relayout so the attention kernel sees clean (N, D)
    # blocks (head offsets like 72*h are not 128-lane aligned, so folding the split
    # into BlockSpecs would force relayouts / masked partial stores instead).
    qkv = qkv.reshape(B, N, 3, num_heads, D).transpose(2, 0, 3, 1, 4)     # (3, B, H, N, D)
    o = attention_core(qkv[0], qkv[1], qkv[2])                            # (B, H, N, D)
    # Merge heads back into a lane-dense (M, C) slab for the output projection.
    o = o.transpose(0, 2, 1, 3).reshape(B * N, C)
    out = linear(o, w_proj, b_proj)                                       # (B*N, C) bf16
    return out.reshape(B, N, C).astype(orig_dtype)


def attention_reference(x, params, num_heads):
    """Pure-JAX f32 reference for correctness checking."""
    B, N, C = x.shape
    D = C // num_heads
    qkv = x.reshape(B * N, C) @ params["w_qkv"] + params["b_qkv"]
    qkv = qkv.reshape(B, N, 3, num_heads, D).transpose(2, 0, 3, 1, 4)
    q, k, v = qkv[0], qkv[1], qkv[2]
    s = jnp.einsum("bhnd,bhmd->bhnm", q, k) / math.sqrt(D)
    p = jax.nn.softmax(s, axis=-1)
    o = jnp.einsum("bhnm,bhmd->bhnd", p, v)
    o = o.transpose(0, 2, 1, 3).reshape(B * N, C)
    out = o @ params["w_proj"] + params["b_proj"]
    return out.reshape(B, N, C)


if __name__ == "__main__":
    # Small smoke-test shapes consistent with the module (dim divisible by 16 heads).
    B, N, dim, num_heads = 2, 8, 128, 16   # head_dim = 8
    key = jax.random.PRNGKey(0)
    kx, kp = jax.random.split(key)
    x = jax.random.normal(kx, (B, N, dim), jnp.float32)
    params = init_attention_params(kp, dim)

    out = attention_forward(x, params, num_heads)
    out = jax.block_until_ready(out)

    ref = attention_reference(x, params, num_heads)
    assert out.shape == (B, N, dim)
    err = float(jnp.max(jnp.abs(out - ref)))
    # bf16 MXU operands (f32 accumulation) => ~1% tolerance vs the pure-f32 reference.
    assert jnp.allclose(out, ref, atol=5e-2, rtol=5e-2), f"max abs err {err}"

    print("KERNEL_OK")
</pallas_src>

<mosaic_0001>
module attributes {stable_mosaic.version = 11 : i64} {
  func.func @_linear_kernel(%arg0: i32, %arg1: i32, %arg2: i32, %arg3: memref<16x128xbf16, #tpu.memory_space<vmem>>, %arg4: memref<128x384xbf16, #tpu.memory_space<vmem>>, %arg5: memref<1x384xbf16, #tpu.memory_space<vmem>>, %arg6: memref<16x384xbf16, #tpu.memory_space<vmem>>, %arg7: memref<16x384xf32, #tpu.memory_space<vmem>>) attributes {dimension_semantics = [#tpu.dimension_semantics<parallel>, #tpu.dimension_semantics<parallel>, #tpu.dimension_semantics<arbitrary>], iteration_bounds = array<i64: 1, 1, 1>, scalar_prefetch = 0 : i64, scratch_operands = 1 : i64, tpu.core_type = #tpu.core_type<tc>, window_params = [{transform_indices = @transform_0, window_bounds = array<i64: 16, 128>}, {transform_indices = @transform_1, window_bounds = array<i64: 128, 384>}, {transform_indices = @transform_2, window_bounds = array<i64: 1, 384>}, {transform_indices = @transform_3, window_bounds = array<i64: 16, 384>}]} {
    %c0_i32 = arith.constant 0 : i32
    %0 = arith.cmpi eq, %arg2, %c0_i32 : i32
    %1 = arith.extui %0 : i1 to i32
    %c0_i32_0 = arith.constant 0 : i32
    %2 = arith.cmpi ne, %1, %c0_i32_0 : i32
    scf.if %2 {
      %cst_10 = arith.constant 0.000000e+00 : f32
      %12 = vector.broadcast %cst_10 : f32 to vector<16x384xf32>
      %c0_11 = arith.constant 0 : index
      %c0_12 = arith.constant 0 : index
      %13 = vector.load %arg7[%c0_11, %c0_12] : memref<16x384xf32, #tpu.memory_space<vmem>>, vector<16x384xf32>
      tpu.vector_store %arg7[%c0_11, %c0_12], %12 {strides = array<i32>} : memref<16x384xf32, #tpu.memory_space<vmem>>, vector<16x384xf32>,
    } else {
    }
    %c0 = arith.constant 0 : index
    %c0_1 = arith.constant 0 : index
    %3 = vector.load %arg3[%c0, %c0_1] : memref<16x128xbf16, #tpu.memory_space<vmem>>, vector<16x128xbf16>
    %c0_2 = arith.constant 0 : index
    %c0_3 = arith.constant 0 : index
    %4 = vector.load %arg4[%c0_2, %c0_3] : memref<128x384xbf16, #tpu.memory_space<vmem>>, vector<128x384xbf16>
    %c0_4 = arith.constant 0 : index
    %c0_5 = arith.constant 0 : index
    %5 = vector.load %arg7[%c0_4, %c0_5] : memref<16x384xf32, #tpu.memory_space<vmem>>, vector<16x384xf32>
    %cst = arith.constant dense<0.000000e+00> : vector<16x384xf32>
    %6 = tpu.matmul %3, %4, %cst {dimension_numbers = #tpu.dot_dimension_numbers<[1], [0], [0], [1], [0, 0, 1, 1], [], []>} : vector<16x128xbf16>, vector<128x384xbf16>, vector<16x384xf32> -> vector<16x384xf32>
    %7 = arith.addf %5, %6 : vector<16x384xf32>
    %c0_6 = arith.constant 0 : index
    %c0_7 = arith.constant 0 : index
    %8 = vector.load %arg7[%c0_6, %c0_7] : memref<16x384xf32, #tpu.memory_space<vmem>>, vector<16x384xf32>
    tpu.vector_store %arg7[%c0_6, %c0_7], %7 {strides = array<i32>} : memref<16x384xf32, #tpu.memory_space<vmem>>, vector<16x384xf32>,
    %c0_i32_8 = arith.constant 0 : i32
    %9 = arith.cmpi eq, %arg2, %c0_i32_8 : i32
    %10 = arith.extui %9 : i1 to i32
    %c0_i32_9 = arith.constant 0 : i32
    %11 = arith.cmpi ne, %10, %c0_i32_9 : i32
    scf.if %11 {
      %c0_10 = arith.constant 0 : index
      %c0_11 = arith.constant 0 : index
      %12 = vector.load %arg7[%c0_10, %c0_11] : memref<16x384xf32, #tpu.memory_space<vmem>>, vector<16x384xf32>
      %c0_12 = arith.constant 0 : index
      %c0_13 = arith.constant 0 : index
      %13 = vector.load %arg5[%c0_12, %c0_13] : memref<1x384xbf16, #tpu.memory_space<vmem>>, vector<1x384xbf16>
      %14 = arith.extf %13 : vector<1x384xbf16> to vector<1x384xf32>
      %15 = vector.broadcast %14 : vector<1x384xf32> to vector<16x384xf32>
      %16 = arith.addf %12, %15 : vector<16x384xf32>
      %17 = arith.truncf %16 : vector<16x384xf32> to vector<16x384xbf16>
      %c0_14 = arith.constant 0 : index
      %c0_15 = arith.constant 0 : index
      %18 = vector.load %arg6[%c0_14, %c0_15] : memref<16x384xbf16, #tpu.memory_space<vmem>>, vector<16x384xbf16>
      tpu.vector_store %arg6[%c0_14, %c0_15], %17 {strides = array<i32>} : memref<16x384xbf16, #tpu.memory_space<vmem>>, vector<16x384xbf16>,
    } else {
    }
    return
  }
  func.func @transform_0(%arg0: i32, %arg1: i32, %arg2: i32) -> (i32, i32) {
    %c0_i32 = arith.constant 0 : i32
    return %arg0, %arg2 : i32, i32
  }
  func.func @transform_1(%arg0: i32, %arg1: i32, %arg2: i32) -> (i32, i32) {
    %c0_i32 = arith.constant 0 : i32
    return %arg2, %arg1 : i32, i32
  }
  func.func @transform_2(%arg0: i32, %arg1: i32, %arg2: i32) -> (i32, i32) {
    %c0_i32 = arith.constant 0 : i32
    %c0_i32_0 = arith.constant 0 : i32
    return %c0_i32, %arg1 : i32, i32
  }
  func.func @transform_3(%arg0: i32, %arg1: i32, %arg2: i32) -> (i32, i32) {
    %c0_i32 = arith.constant 0 : i32
    return %arg0, %arg1 : i32, i32
  }
}

</mosaic_0001>

<llo_original>
// kernel: tpu_custom_call.1
$region0: #{tpu_custom_call.1}
  #allocation0 [shape = 'u32[]', space=smem, size = 0x4, offset = 0x4, fixed_abs, tag = 'smem constant byte address 0x4 - core index']
  #allocation1 [shape = 'u32[144,128]{1,0:T(1,128)}', space=vmem, size = 0x12000, scoped, tag = 'internal scratch']
  #allocation2 [shape = 'f32[16,384]{1,0:T(8,128)}', space=vmem, size = 0x6000, scoped, tag = 'scratch operand']
  %s0 = inlined_call_operand.hbm [shape: bf16[16,128], index: 0, kind: input, shape index: {}]
  %s1 = inlined_call_operand.hbm [shape: bf16[128,384], index: 1, kind: input, shape index: {}]
  %s2 = inlined_call_operand.vmem [shape: bf16[1,384], index: 2, kind: input, shape index: {}]
  %s3 = inlined_call_operand.hbm [shape: bf16[16,384], index: 3, kind: output, shape index: {}]
  %s4 = sld [smem:[#allocation0]]
  $region38: #{tpu_custom_call.1} parent=0
    _
  %s6 = ssub.s32 1, %s4
  %s7 = scalar_select 0, %s6, %s4
  $region1: #{tpu_custom_call.1} parent=0
    #allocation3 [shape = 'u8[4096]{0}', space=vmem, size = 0x1000, scoped, tag = 'input window, operand 0, single buffered']
    #allocation4 [shape = 's32[1]{0}', space=sflag, size = 0x4, scoped, tag = 'scoped memory for tpu_custom_call.1']
    #allocation5 [shape = 's32[1]{0}', space=sflag, size = 0x4, scoped, tag = 'scoped memory for tpu_custom_call.1']
    #allocation6 [shape = 'u8[98304]{0}', space=vmem, size = 0x18000, scoped, tag = 'input window, operand 1, single buffered']
    #allocation7 [shape = 's32[1]{0}', space=sflag, size = 0x4, scoped, tag = 'scoped memory for tpu_custom_call.1']
    #allocation8 [shape = 'u8[12288]{0}', space=vmem, size = 0x3000, scoped, tag = 'output window, operand 0, single buffered']
    %8 = vsyncpa [#allocation4], 0
    %9 = vsyncpa [#allocation7], 0
    %10 = vsyncpa [#allocation5], 0
    // Predicated region
    $region2: #{tpu_custom_call.1} parent=1 // pred_check
      _
    $region3: #{tpu_custom_call.1} parent=1 // pred_check_branch
      %12 = sbr.rel (0) target = $region5
    $region4: #{tpu_custom_call.1} parent=1 // pred_region
      %s14 = ssub.s32 128, 128
      %15 = vsyncadd [#allocation4], %s14
      %s16 = sshll.u32 [#allocation3], 4
      %s17 = int_to_ptr.vmem [resolvable:$true] %s16
      %22 = dma.hbm_to_vmem [thread:$0]  %s0, 128, %s17, [#allocation4], 64, 64, 4
    $region5: #{tpu_custom_call.1} parent=1 // pred_fallthru
      _
    // Predicated region
    $region6: #{tpu_custom_call.1} parent=1 // pred_check
      _
    $region7: #{tpu_custom_call.1} parent=1 // pred_check_branch
      %24 = sbr.rel (0) target = $region9
    $region8: #{tpu_custom_call.1} parent=1 // pred_region
      %s26 = ssub.s32 3072, 3072
      %27 = vsyncadd [#allocation7], %s26
      %s28 = sshll.u32 [#allocation6], 4
      %s29 = int_to_ptr.vmem [resolvable:$true] %s28
      %34 = dma.hbm_to_vmem [thread:$0]  %s1, 3072, %s29, [#allocation7], 192, 192, 12
    $region9: #{tpu_custom_call.1} parent=1 // pred_fallthru
      _
    // Predicated region
    $region10: #{tpu_custom_call.1} parent=1 // pred_check
      _
    $region11: #{tpu_custom_call.1} parent=1 // pred_check_branch
      %36 = sbr.rel (0) target = $region13
    $region12: #{tpu_custom_call.1} parent=1 // pred_region
      _
    $region13: #{tpu_custom_call.1} parent=1 // pred_fallthru
      _
    // Predicated region
    $region14: #{tpu_custom_call.1} parent=1 // pred_check
      _
    $region15: #{tpu_custom_call.1} parent=1 // pred_check_branch
      %38 = sbr.rel (0) target = $region17
    $region16: #{tpu_custom_call.1} parent=1 // pred_region
      %39 = dma.done [#allocation4], 128
    $region17: #{tpu_custom_call.1} parent=1 // pred_fallthru
      _
    // Predicated region
    $region18: #{tpu_custom_call.1} parent=1 // pred_check
      _
    $region19: #{tpu_custom_call.1} parent=1 // pred_check_branch
      %41 = sbr.rel (0) target = $region21
    $region20: #{tpu_custom_call.1} parent=1 // pred_region
      %42 = dma.done [#allocation7], 3072
    $region21: #{tpu_custom_call.1} parent=1 // pred_fallthru
      _
    %p44 = scmp.eq.s32.totalorder 0, 0
    // Predicated region
    $region22: #{tpu_custom_call.1} parent=1 // pred_check
      %p45 = pneg %p44
    $region23: #{tpu_custom_call.1} parent=1 // pred_check_branch
      %47 = sbr.rel (%p45) target = $region25
    $region24: #{tpu_custom_call.1} parent=1 // pred_region
      %48 = vst [vmem:[#allocation2] sm:$0xff] 0.0
      %49 = vst [vmem:[#allocation2 + $0x8] sm:$0xff] 0.0
      %50 = vst [vmem:[#allocation2 + $0x10] sm:$0xff] 0.0
      %51 = vst [vmem:[#allocation2 + $0x18] sm:$0xff] 0.0
      %52 = vst [vmem:[#allocation2 + $0x20] sm:$0xff] 0.0
      %53 = vst [vmem:[#allocation2 + $0x28] sm:$0xff] 0.0
    $region25: #{tpu_custom_call.1} parent=1 // pred_fallthru
      _
    %v54 = vld [vmem:[#allocation3] sm:$0xf]
    %v55 = vld [vmem:[#allocation3 + $0x4] sm:$0xf]
    %v56 = vld [vmem:[#allocation6] sm:$0xff]
    %v57 = vld [vmem:[#allocation6 + $0x8] sm:$0xf]
    %v58 = vld [vmem:[#allocation6 + $0xc] sm:$0xff]
    %v59 = vld [vmem:[#allocation6 + $0x14] sm:$0xf]
    %v60 = vld [vmem:[#allocation6 + $0x18] sm:$0xff]
    %v61 = vld [vmem:[#allocation6 + $0x20] sm:$0xf]
    %v62 = vld [vmem:[#allocation6 + $0x24] sm:$0xff]
    %v63 = vld [vmem:[#allocation6 + $0x2c] sm:$0xf]
    %v64 = vld [vmem:[#allocation6 + $0x30] sm:$0xff]
    %v65 = vld [vmem:[#allocation6 + $0x38] sm:$0xf]
    %v66 = vld [vmem:[#allocation6 + $0x3c] sm:$0xff]
    %v67 = vld [vmem:[#allocation6 + $0x44] sm:$0xf]
    %v68 = vld [vmem:[#allocation6 + $0x48] sm:$0xff]
    %v69 = vld [vmem:[#allocation6 + $0x50] sm:$0xf]
    %v70 = vld [vmem:[#allocation6 + $0x54] sm:$0xff]
    %v71 = vld [vmem:[#allocation6 + $0x5c] sm:$0xf]
    %v72 = vld [vmem:[#allocation6 + $0x60] sm:$0xff]
    %v73 = vld [vmem:[#allocation6 + $0x68] sm:$0xf]
    %v74 = vld [vmem:[#allocation6 + $0x6c] sm:$0xff]
    %v75 = vld [vmem:[#allocation6 + $0x74] sm:$0xf]
    %v76 = vld [vmem:[#allocation6 + $0x78] sm:$0xff]
    %v77 = vld [vmem:[#allocation6 + $0x80] sm:$0xf]
    %v78 = vld [vmem:[#allocation6 + $0x84] sm:$0xff]
    %v79 = vld [vmem:[#allocation6 + $0x8c] sm:$0xf]
    %v80 = vld [vmem:[#allocation6 + $0x90] sm:$0xff]
    %v81 = vld [vmem:[#allocation6 + $0x98] sm:$0xf]
    %v82 = vld [vmem:[#allocation6 + $0x9c] sm:$0xff]
    %v83 = vld [vmem:[#allocation6 + $0xa4] sm:$0xf]
    %v84 = vld [vmem:[#allocation6 + $0xa8] sm:$0xff]
    %v85 = vld [vmem:[#allocation6 + $0xb0] sm:$0xf]
    %v86 = vld [vmem:[#allocation6 + $0xb4] sm:$0xff]
    %v87 = vld [vmem:[#allocation6 + $0xbc] sm:$0xf]
    %v88 = vld [vmem:[#allocation2] sm:$0xff]
    %v89 = vld [vmem:[#allocation2 + $0x8] sm:$0xff]
    %v90 = vld [vmem:[#allocation2 + $0x10] sm:$0xff]
    %v91 = vld [vmem:[#allocation2 + $0x18] sm:$0xff]
    %v92 = vld [vmem:[#allocation2 + $0x20] sm:$0xff]
    %v93 = vld [vmem:[#allocation2 + $0x28] sm:$0xff]
    %v96 = vunpack.c.l.b16 %v54
    %v97 = vunpack.c.l.b16 %v55
    %v98 = vpack.c.b16 %v97, %v96
    %v132 = vunpack.c.l.b16 %v56
    %v133 = vunpack.c.h.b16 %v56
    %v134 = vunpack.c.l.b16 %v57
    %v135 = vunpack.c.l.b16 %v58
    %v136 = vunpack.c.h.b16 %v58
    %v137 = vunpack.c.l.b16 %v59
    %v138 = vunpack.c.l.b16 %v60
    %v139 = vunpack.c.h.b16 %v60
    %v140 = vunpack.c.l.b16 %v61
    %v141 = vunpack.c.l.b16 %v62
    %v142 = vunpack.c.h.b16 %v62
    %v143 = vunpack.c.l.b16 %v63
    %v144 = vunpack.c.l.b16 %v64
    %v145 = vunpack.c.h.b16 %v64
    %v146 = vunpack.c.l.b16 %v65
    %v147 = vunpack.c.l.b16 %v66
    %v148 = vunpack.c.h.b16 %v66
    %v149 = vunpack.c.l.b16 %v67
    %v150 = vunpack.c.l.b16 %v68
    %v151 = vunpack.c.h.b16 %v68
    %v152 = vunpack.c.l.b16 %v69
    %v153 = vunpack.c.l.b16 %v70
    %v154 = vunpack.c.h.b16 %v70
    %v155 = vunpack.c.l.b16 %v71
    %v156 = vunpack.c.l.b16 %v72
    %v157 = vunpack.c.h.b16 %v72
    %v158 = vunpack.c.l.b16 %v73
    %v159 = vunpack.c.l.b16 %v74
    %v160 = vunpack.c.h.b16 %v74
    %v161 = vunpack.c.l.b16 %v75
    %v162 = vunpack.c.l.b16 %v76
    %v163 = vunpack.c.h.b16 %v76
    %v164 = vunpack.c.l.b16 %v77
    %v165 = vunpack.c.l.b16 %v78
    %v166 = vunpack.c.h.b16 %v78
    %v167 = vunpack.c.l.b16 %v79
    %v168 = vunpack.c.l.b16 %v80
    %v169 = vunpack.c.h.b16 %v80
    %v170 = vunpack.c.l.b16 %v81
    %v171 = vunpack.c.l.b16 %v82
    %v172 = vunpack.c.h.b16 %v82
    %v173 = vunpack.c.l.b16 %v83
    %v174 = vunpack.c.l.b16 %v84
    %v175 = vunpack.c.h.b16 %v84
    %v176 = vunpack.c.l.b16 %v85
    %v177 = vunpack.c.l.b16 %v86
    %v178 = vunpack.c.h.b16 %v86
    %v179 = vunpack.c.l.b16 %v87
    %v180 = vpack.c.b16 %v135, %v132
    %v181 = vpack.c.b16 %v136, %v133
    %v182 = vpack.c.b16 %v137, %v134
    %v183 = vpack.c.b16 %v141, %v138
    %v184 = vpack.c.b16 %v142, %v139
    %v185 = vpack.c.b16 %v143, %v140
    %v186 = vpack.c.b16 %v147, %v144
    %v187 = vpack.c.b16 %v148, %v145
    %v188 = vpack.c.b16 %v149, %v146
    %v189 = vpack.c.b16 %v153, %v150
    %v190 = vpack.c.b16 %v154, %v151
    %v191 = vpack.c.b16 %v155, %v152
    %v192 = vpack.c.b16 %v159, %v156
    %v193 = vpack.c.b16 %v160, %v157
    %v194 = vpack.c.b16 %v161, %v158
    %v195 = vpack.c.b16 %v165, %v162
    %v196 = vpack.c.b16 %v166, %v163
    %v197 = vpack.c.b16 %v167, %v164
    %v198 = vpack.c.b16 %v171, %v168
    %v199 = vpack.c.b16 %v172, %v169
    %v200 = vpack.c.b16 %v173, %v170
    %v201 = vpack.c.b16 %v177, %v174
    %v202 = vpack.c.b16 %v178, %v175
    %v203 = vpack.c.b16 %v179, %v176
    %228 = vmatprep.subr.bf16.mxu0 %v202
    %229 = vmatpush1.bf16.msra.mxu0 %v201
    %230 = vmatprep.subr.bf16.mxu0 %v199
    %231 = vmatpush1.bf16.msra.mxu0 %v198
    %232 = vmatprep.subr.bf16.mxu0 %v196
    %233 = vmatpush1.bf16.msra.mxu0 %v195
    %234 = vmatprep.subr.bf16.mxu0 %v193
    %235 = vmatpush1.bf16.msra.mxu0 %v192
    %236 = vmatprep.subr.bf16.mxu0 %v190
    %237 = vmatpush1.bf16.msra.mxu0 %v189
    %238 = vmatprep.subr.bf16.mxu0 %v187
    %239 = vmatpush1.bf16.msra.mxu0 %v186
    %240 = vmatprep.subr.bf16.mxu0 %v184
    %241 = vmatpush1.bf16.msra.mxu0 %v183
    %242 = vmatprep.subr.bf16.mxu0 %v181
    %243 = vmatpush1.bf16.msra.mxu0 %v180
    %244 = vmatprep.subr.bf16.mxu0 0
    %245 = vmatpush2.bf16.msra.mxu0 0
    %246 = vmatprep.subr.bf16.mxu0 0
    %247 = vmatpush2.bf16.msra.mxu0 0
    %248 = vmatprep.subr.bf16.mxu0 0
    %249 = vmatpush2.bf16.msra.mxu0 0
    %250 = vmatprep.subr.bf16.mxu0 0
    %251 = vmatpush2.bf16.msra.mxu0 0
    %252 = vmatprep.subr.bf16.mxu0 0
    %253 = vmatpush2.bf16.msra.mxu0 0
    %254 = vmatprep.subr.bf16.mxu0 0
    %255 = vmatpush2.bf16.msra.mxu0 0
    %256 = vmatprep.subr.bf16.mxu0 0
    %257 = vmatpush2.bf16.msra.mxu0 0
    %258 = vmatprep.subr.bf16.mxu0 0
    %259 = vmatpush2.bf16.msra.mxu0 0
    %260 = vmatprep.mubr.bf16.mxu0 0
    %261 = vmatmul.mubr.bf16.gmra.mxu0 %v98
    %v262 = vpop.f32.mrf.mxu0
    %v263 = vadd.f32 0.0, %v262
    %v264 = vpop.f32.mrf.mxu0
    %v265 = vadd.f32 0.0, %v264
    %v266 = vpop.f32.mrf.mxu0
    %v267 = vadd.f32 0.0, %v266
    %v268 = vpop.f32.mrf.mxu0
    %v269 = vadd.f32 0.0, %v268
    %270 = vdwg.mxu0
    %271 = vmatprep.subr.bf16.mxu0 0
    %272 = vmatpush1.bf16.msra.mxu0 %v203
    %273 = vmatprep.subr.bf16.mxu0 0
    %274 = vmatpush1.bf16.msra.mxu0 %v200
    %275 = vmatprep.subr.bf16.mxu0 0
    %276 = vmatpush1.bf16.msra.mxu0 %v197
    %277 = vmatprep.subr.bf16.mxu0 0
    %278 = vmatpush1.bf16.msra.mxu0 %v194
    %279 = vmatprep.subr.bf16.mxu0 0
    %280 = vmatpush1.bf16.msra.mxu0 %v191
    %281 = vmatprep.subr.bf16.mxu0 0
    %282 = vmatpush1.bf16.msra.mxu0 %v188
    %283 = vmatprep.subr.bf16.mxu0 0
    %284 = vmatpush1.bf16.msra.mxu0 %v185
    %285 = vmatprep.subr.bf16.mxu0 0
    %286 = vmatpush1.bf16.msra.mxu0 %v182
    %287 = vmatprep.subr.bf16.mxu0 0
    %288 = vmatpush2.bf16.msra.mxu0 0
    %289 = vmatprep.subr.bf16.mxu0 0
    %290 = vmatpush2.bf16.msra.mxu0 0
    %291 = vmatprep.subr.bf16.mxu0 0
    %292 = vmatpush2.bf16.msra.mxu0 0
    %293 = vmatprep.subr.bf16.mxu0 0
    %294 = vmatpush2.bf16.msra.mxu0 0
    %295 = vmatprep.subr.bf16.mxu0 0
    %296 = vmatpush2.bf16.msra.mxu0 0
    %297 = vmatprep.subr.bf16.mxu0 0
    %298 = vmatpush2.bf16.msra.mxu0 0
    %299 = vmatprep.subr.bf16.mxu0 0
    %300 = vmatpush2.bf16.msra.mxu0 0
    %301 = vmatprep.subr.bf16.mxu0 0
    %302 = vmatpush2.bf16.msra.mxu0 0
    %303 = vmatprep.mubr.bf16.mxu0 0
    %304 = vmatmul.mubr.bf16.gmra.mxu0 %v98
    %v305 = vpop.f32.mrf.mxu0
    %v306 = vadd.f32 0.0, %v305
    %v307 = vpop.f32.mrf.mxu0
    %v308 = vpop.f32.mrf.mxu0
    %v309 = vadd.f32 0.0, %v308
    %v310 = vpop.f32.mrf.mxu0
    %311 = vdwg.mxu0
    %v312 = vadd.f32 %v88, %v263
    %v313 = vadd.f32 %v89, %v265
    %v314 = vadd.f32 %v90, %v306
    %v315 = vadd.f32 %v91, %v267
    %v316 = vadd.f32 %v92, %v269
    %v317 = vadd.f32 %v93, %v309
    %318 = vst [vmem:[#allocation2] sm:$0xff] %v312
    %319 = vst [vmem:[#allocation2 + $0x8] sm:$0xff] %v313
    %320 = vst [vmem:[#allocation2 + $0x10] sm:$0xff] %v314
    %321 = vst [vmem:[#allocation2 + $0x18] sm:$0xff] %v315
    %322 = vst [vmem:[#allocation2 + $0x20] sm:$0xff] %v316
    %323 = vst [vmem:[#allocation2 + $0x28] sm:$0xff] %v317
    // Predicated region
    $region26: #{tpu_custom_call.1} parent=1 // pred_check
      %p324 = pneg %p44
    $region27: #{tpu_custom_call.1} parent=1 // pred_check_branch
      %326 = sbr.rel (%p324) target = $region29
    $region28: #{tpu_custom_call.1} parent=1 // pred_region
      %v327 = vld [vmem:[#allocation2] sm:$0xff]
      %v328 = vld [vmem:[#allocation2 + $0x8] sm:$0xff]
      %v329 = vld [vmem:[#allocation2 + $0x10] sm:$0xff]
      %v330 = vld [vmem:[#allocation2 + $0x18] sm:$0xff]
      %v331 = vld [vmem:[#allocation2 + $0x20] sm:$0xff]
      %v332 = vld [vmem:[#allocation2 + $0x28] sm:$0xff]
      %v333 = vld [vmem:[%s2] sm:$0x7]
      %v334 = vunpack.c.l.bf16 %v333
      %v336 = vlaneseq
      %v337 = vshrl.u32 %v336, 7
      %v338 = vsub.s32 0, %v337
      %v339 = vrot.slane %v334, %v338
      %v340 = vlaneseq
      %v341 = vshrl.u32 %v340, 7
      %v342 = vsub.s32 2, %v341
      %v343 = vrot.slane %v334, %v342
      %v344 = vlaneseq
      %v345 = vshrl.u32 %v344, 7
      %v346 = vsub.s32 4, %v345
      %v347 = vrot.slane %v334, %v346
      %v351 = vlaneseq
      %v352 = vshrl.u32 %v351, 7
      %v353 = vsub.s32 0, %v352
      %v354 = vrot.slane %v339, %v353
      %v355 = vlaneseq
      %v356 = vshrl.u32 %v355, 7
      %v357 = vsub.s32 0, %v356
      %v358 = vrot.slane %v343, %v357
      %v359 = vlaneseq
      %v360 = vshrl.u32 %v359, 7
      %v361 = vsub.s32 0, %v360
      %v362 = vrot.slane %v347, %v361
      %v363 = vadd.f32 %v327, %v354
      %v364 = vadd.f32 %v328, %v358
      %v365 = vadd.f32 %v329, %v362
      %v366 = vadd.f32 %v330, %v354
      %v367 = vadd.f32 %v331, %v358
      %v368 = vadd.f32 %v332, %v362
      %v369 = vpack.c.bf16 %v366, %v363
      %v370 = vpack.c.bf16 %v367, %v364
      %v371 = vpack.c.bf16 %v368, %v365
      %v375 = vunpack.c.l.b16 %v369
      %v376 = vunpack.c.l.b16 %v370
      %v377 = vunpack.c.l.b16 %v371
      %v378 = vunpack.c.h.b16 %v369
      %v379 = vunpack.c.h.b16 %v370
      %v380 = vunpack.c.h.b16 %v371
      %v381 = vpack.c.b16 %v376, %v375
      %v382 = vpack.c.b16 %v377, %v377
      %v383 = vpack.c.b16 %v379, %v378
      %v384 = vpack.c.b16 %v380, %v380
      %389 = vst [vmem:[#allocation8] sm:$0xff] %v381
      %390 = vst [vmem:[#allocation8 + $0x8] sm:$0xf] %v382
      %391 = vst [vmem:[#allocation8 + $0xc] sm:$0xff] %v383
      %392 = vst [vmem:[#allocation8 + $0x14] sm:$0xf] %v384
    $region29: #{tpu_custom_call.1} parent=1 // pred_fallthru
      _
    // Predicated region
    $region30: #{tpu_custom_call.1} parent=1 // pred_check
      _
    $region31: #{tpu_custom_call.1} parent=1 // pred_check_branch
      %394 = sbr.rel (0) target = $region33
    $region32: #{tpu_custom_call.1} parent=1 // pred_region
      %s396 = ssub.s32 384, 384
      %397 = vsyncadd [#allocation5], %s396
      %s398 = sshll.u32 [#allocation8], 4
      %s399 = int_to_ptr.vmem [resolvable:$true] %s398
      %404 = dma.vmem_to_hbm [thread:$0]  %s399, 384, %s3, [#allocation5], 192, 192, 12
    $region33: #{tpu_custom_call.1} parent=1 // pred_fallthru
      _
    // Predicated region
    $region34: #{tpu_custom_call.1} parent=1 // pred_check
      _
    $region35: #{tpu_custom_call.1} parent=1 // pred_check_branch
      %406 = sbr.rel (0) target = $region37
    $region36: #{tpu_custom_call.1} parent=1 // pred_region
      %407 = dma.done [#allocation5], 384
    $region37: #{tpu_custom_call.1} parent=1 // pred_fallthru
      _
    %408 = vsyncpa [#allocation4], 1
    %409 = vsyncpa [#allocation7], 1
    %410 = vsyncpa [#allocation5], 1

</llo_original>
